<compile_context>
chip_gen: v7x
topology: tpu7x:2x2x1
jax: 0.10.0
libtpu: 0.0.40
codegen_flags: <defaults>
</compile_context>

<pallas_src>
import jax
import jax.numpy as jnp
from jax import lax
from jax.experimental import pallas as pl
from jax.experimental.pallas import tpu as pltpu


# ------------------------------- the kernel -------------------------------

def _zero_scale_kernel(x_ref, c_ref, w_ref, b_ref, o_ref):
    c = c_ref[...]                                   # (B, D) f32
    # SiLU(c) = c * sigmoid(c); the exp() runs on the EUP slot (free vs VPU).
    silu = c * (1.0 / (1.0 + jnp.exp(-c)))
    # PyTorch nn.Linear semantics: scale = silu @ W.T + b, with W: (D_out, D_in)
    scale = lax.dot_general(
        silu, w_ref[...], (((1,), (1,)), ((), ())),
        preferred_element_type=jnp.float32) + b_ref[...]   # (B, D)
    # x * scale[None]  -- broadcast over the leading (token/time) axis.
    o_ref[...] = (x_ref[...] * scale[None, :, :]).astype(o_ref.dtype)


# -------------------------------- wrapper ----------------------------------

def zero_scale_mod(x, c, w, b):
    """x: (T, B, D); c: (B, D); w: (D, D) nn.Linear weight; b: (D,) bias."""
    T, B, D = x.shape
    vmem = lambda: pl.BlockSpec(memory_space=pltpu.MemorySpace.VMEM)
    return pl.pallas_call(
        _zero_scale_kernel,
        out_shape=jax.ShapeDtypeStruct((T, B, D), x.dtype),
        # Whole arrays as single VMEM blocks: no grid, no per-step overhead.
        in_specs=[vmem(), vmem(), vmem(), vmem()],
        out_specs=vmem(),
    )(x, c, w, b.reshape(1, D))


# --------------------------- pure-JAX reference -----------------------------

def reference(x, c, w, b):
    s = jax.nn.silu(c)                 # c * sigmoid(c)
    scale = s @ w.T + b                # nn.Linear
    return x * scale[None]


# ---------------------------------- main ------------------------------------

if __name__ == "__main__":
    # Small shapes consistent with the module's use in the diffusion head:
    # tokens T=8, batch B=2, hidden dim D=32.
    T, B, D = 8, 2, 32

    key = jax.random.PRNGKey(0)
    kx, kc, kw, kb = jax.random.split(key, 4)

    x = jax.random.normal(kx, (T, B, D), jnp.float32)
    c = jax.random.normal(kc, (B, D), jnp.float32)

    # nn.Linear(dim, dim) parameters.  Random (non-zero) values to exercise the
    # math; the module's reset_parameters() would zero them -> all-zero output.
    limit = 1.0 / (D ** 0.5)
    w = jax.random.uniform(kw, (D, D), jnp.float32, -limit, limit)
    b = jax.random.uniform(kb, (D,), jnp.float32, -limit, limit)

    out = zero_scale_mod(x, c, w, b)
    out = jax.block_until_ready(out)

    with jax.default_matmul_precision("float32"):
        ref = reference(x, c, w, b)
    ref = jax.block_until_ready(ref)

    assert out.shape == (T, B, D)
    assert jnp.allclose(out, ref, rtol=1e-3, atol=1e-3), (
        f"max abs err {jnp.max(jnp.abs(out - ref))}")

    print("KERNEL_OK")
</pallas_src>

<mosaic_0001>
module attributes {stable_mosaic.version = 11 : i64} {
  func.func @_zero_scale_kernel(%arg0: memref<8x2x32xf32, #tpu.memory_space<vmem>>, %arg1: memref<2x32xf32, #tpu.memory_space<vmem>>, %arg2: memref<32x32xf32, #tpu.memory_space<vmem>>, %arg3: memref<1x32xf32, #tpu.memory_space<vmem>>, %arg4: memref<8x2x32xf32, #tpu.memory_space<vmem>>) attributes {dimension_semantics = [], scalar_prefetch = 0 : i64, scratch_operands = 0 : i64, tpu.core_type = #tpu.core_type<tc>} {
    %c0 = arith.constant 0 : index
    %c0_0 = arith.constant 0 : index
    %0 = vector.load %arg1[%c0, %c0_0] : memref<2x32xf32, #tpu.memory_space<vmem>>, vector<2x32xf32>
    %cst = arith.constant 0.000000e+00 : f32
    %1 = vector.broadcast %cst : f32 to vector<2x32xf32>
    %2 = arith.subf %1, %0 : vector<2x32xf32>
    %3 = math.exp %2 : vector<2x32xf32>
    %cst_1 = arith.constant 1.000000e+00 : f32
    %4 = vector.broadcast %cst_1 : f32 to vector<2x32xf32>
    %5 = arith.addf %4, %3 : vector<2x32xf32>
    %cst_2 = arith.constant 1.000000e+00 : f32
    %6 = vector.broadcast %cst_2 : f32 to vector<2x32xf32>
    %7 = arith.divf %6, %5 : vector<2x32xf32>
    %8 = arith.mulf %0, %7 : vector<2x32xf32>
    %c0_3 = arith.constant 0 : index
    %c0_4 = arith.constant 0 : index
    %9 = vector.load %arg2[%c0_3, %c0_4] : memref<32x32xf32, #tpu.memory_space<vmem>>, vector<32x32xf32>
    %cst_5 = arith.constant dense<0.000000e+00> : vector<2x32xf32>
    %10 = tpu.matmul %8, %9, %cst_5 {dimension_numbers = #tpu.dot_dimension_numbers<[1], [1], [0], [0], [0, 0, 1, 0], [], []>} : vector<2x32xf32>, vector<32x32xf32>, vector<2x32xf32> -> vector<2x32xf32>
    %c0_6 = arith.constant 0 : index
    %c0_7 = arith.constant 0 : index
    %11 = vector.load %arg3[%c0_6, %c0_7] : memref<1x32xf32, #tpu.memory_space<vmem>>, vector<1x32xf32>
    %12 = vector.broadcast %11 : vector<1x32xf32> to vector<2x32xf32>
    %13 = arith.addf %10, %12 : vector<2x32xf32>
    %c0_8 = arith.constant 0 : index
    %c0_9 = arith.constant 0 : index
    %c0_10 = arith.constant 0 : index
    %14 = vector.load %arg0[%c0_8, %c0_9, %c0_10] : memref<8x2x32xf32, #tpu.memory_space<vmem>>, vector<8x2x32xf32>
    %15 = vector.shape_cast %13 : vector<2x32xf32> to vector<1x2x32xf32>
    %16 = vector.broadcast %15 : vector<1x2x32xf32> to vector<8x2x32xf32>
    %17 = arith.mulf %14, %16 : vector<8x2x32xf32>
    %c0_11 = arith.constant 0 : index
    %c0_12 = arith.constant 0 : index
    %c0_13 = arith.constant 0 : index
    %18 = vector.load %arg4[%c0_11, %c0_12, %c0_13] : memref<8x2x32xf32, #tpu.memory_space<vmem>>, vector<8x2x32xf32>
    tpu.vector_store %arg4[%c0_11, %c0_12, %c0_13], %17 {strides = array<i32>} : memref<8x2x32xf32, #tpu.memory_space<vmem>>, vector<8x2x32xf32>,
    return
  }
}

</mosaic_0001>

<llo_original>
// kernel: tpu_custom_call.1
$region0: #{tpu_custom_call.1}
  #allocation0 [shape = 'u32[]', space=smem, size = 0x4, offset = 0x4, fixed_abs, tag = 'smem constant byte address 0x4 - core index']
  #allocation1 [shape = 'u32[144,128]{1,0:T(1,128)}', space=vmem, size = 0x12000, scoped, tag = 'internal scratch']
  %s0 = inlined_call_operand.hbm [shape: f32[8,2,32], index: 0, kind: input, shape index: {}]
  %s1 = inlined_call_operand.vmem [shape: f32[2,32], index: 1, kind: input, shape index: {}]
  %s2 = inlined_call_operand.hbm [shape: f32[32,32], index: 2, kind: input, shape index: {}]
  %s3 = inlined_call_operand.vmem [shape: f32[1,32], index: 3, kind: input, shape index: {}]
  %s4 = inlined_call_operand.hbm [shape: f32[8,2,32], index: 4, kind: output, shape index: {}]
  %s5 = sld [smem:[#allocation0]]
  $region34: #{tpu_custom_call.1} parent=0
    _
  %s7 = ssub.s32 1, %s5
  %s8 = scalar_select 0, %s7, %s5
  $region1: #{tpu_custom_call.1} parent=0
    #allocation2 [shape = 'u8[8192]{0}', space=vmem, size = 0x2000, scoped, tag = 'input window, operand 0, single buffered']
    #allocation3 [shape = 's32[1]{0}', space=sflag, size = 0x4, scoped, tag = 'scoped memory for tpu_custom_call.1']
    #allocation4 [shape = 's32[1]{0}', space=sflag, size = 0x4, scoped, tag = 'scoped memory for tpu_custom_call.1']
    #allocation5 [shape = 'u8[16384]{0}', space=vmem, size = 0x4000, scoped, tag = 'input window, operand 2, single buffered']
    #allocation6 [shape = 's32[1]{0}', space=sflag, size = 0x4, scoped, tag = 'scoped memory for tpu_custom_call.1']
    #allocation7 [shape = 'u8[8192]{0}', space=vmem, size = 0x2000, scoped, tag = 'output window, operand 0, single buffered']
    %9 = vsyncpa [#allocation3], 0
    %10 = vsyncpa [#allocation6], 0
    %11 = vsyncpa [#allocation4], 0
    // Predicated region
    $region2: #{tpu_custom_call.1} parent=1 // pred_check
      _
    $region3: #{tpu_custom_call.1} parent=1 // pred_check_branch
      %13 = sbr.rel (0) target = $region5
    $region4: #{tpu_custom_call.1} parent=1 // pred_region
      %s15 = ssub.s32 256, 256
      %16 = vsyncadd [#allocation3], %s15
      %s17 = sshll.u32 [#allocation2], 4
      %s18 = int_to_ptr.vmem [resolvable:$true] %s17
      %23 = dma.hbm_to_vmem [thread:$0]  %s0, 256, %s18, [#allocation3], 32, 32, 2
    $region5: #{tpu_custom_call.1} parent=1 // pred_fallthru
      _
    // Predicated region
    $region6: #{tpu_custom_call.1} parent=1 // pred_check
      _
    $region7: #{tpu_custom_call.1} parent=1 // pred_check_branch
      %25 = sbr.rel (0) target = $region9
    $region8: #{tpu_custom_call.1} parent=1 // pred_region
      _
    $region9: #{tpu_custom_call.1} parent=1 // pred_fallthru
      _
    // Predicated region
    $region10: #{tpu_custom_call.1} parent=1 // pred_check
      _
    $region11: #{tpu_custom_call.1} parent=1 // pred_check_branch
      %27 = sbr.rel (0) target = $region13
    $region12: #{tpu_custom_call.1} parent=1 // pred_region
      %s29 = ssub.s32 512, 512
      %30 = vsyncadd [#allocation6], %s29
      %s31 = sshll.u32 [#allocation5], 4
      %s32 = int_to_ptr.vmem [resolvable:$true] %s31
      %37 = dma.hbm_to_vmem [thread:$0]  %s2, 512, %s32, [#allocation6], 128, 128, 8
    $region13: #{tpu_custom_call.1} parent=1 // pred_fallthru
      _
    // Predicated region
    $region14: #{tpu_custom_call.1} parent=1 // pred_check
      _
    $region15: #{tpu_custom_call.1} parent=1 // pred_check_branch
      %39 = sbr.rel (0) target = $region17
    $region16: #{tpu_custom_call.1} parent=1 // pred_region
      _
    $region17: #{tpu_custom_call.1} parent=1 // pred_fallthru
      _
    // Predicated region
    $region18: #{tpu_custom_call.1} parent=1 // pred_check
      _
    $region19: #{tpu_custom_call.1} parent=1 // pred_check_branch
      %41 = sbr.rel (0) target = $region21
    $region20: #{tpu_custom_call.1} parent=1 // pred_region
      %42 = dma.done [#allocation3], 256
    $region21: #{tpu_custom_call.1} parent=1 // pred_fallthru
      _
    // Predicated region
    $region22: #{tpu_custom_call.1} parent=1 // pred_check
      _
    $region23: #{tpu_custom_call.1} parent=1 // pred_check_branch
      %44 = sbr.rel (0) target = $region25
    $region24: #{tpu_custom_call.1} parent=1 // pred_region
      %45 = dma.done [#allocation6], 512
    $region25: #{tpu_custom_call.1} parent=1 // pred_fallthru
      _
    %v46 = vld [vmem:[%s1] sm:$0x3]
    %v47 = vsub.f32 0.0, %v46
    %v48 = vmul.f32 %v47, 1.442695
    %v49 = vpow.pop %v48
    %v50 = vadd.f32 %v49, 1.0
    %v51 = vrcp.pop %v50
    %v52 = vmul.f32 1.0, %v51
    %v53 = vmul.f32 %v46, %v52
    %v54 = vld [vmem:[#allocation5] sm:$0xff]
    %v55 = vld [vmem:[#allocation5 + $0x8] sm:$0xff]
    %v56 = vld [vmem:[#allocation5 + $0x10] sm:$0xff]
    %v57 = vld [vmem:[#allocation5 + $0x18] sm:$0xff]
    %v58 = vld [vmem:[%s3] sm:$0x1]
    %v60 = vlaneseq
    %v61 = vshrl.u32 %v60, 7
    %v62 = vsub.s32 0, %v61
    %v63 = vrot.slane %v58, %v62
    %vm65 = vcmask 261120
    %v67 = vsel %vm65, %v53, 0
    %v70 = vsel %vm65, %v54, 0
    %v73 = vsel %vm65, %v55, 0
    %v76 = vsel %vm65, %v56, 0
    %v79 = vsel %vm65, %v57, 0
    %81 = vmatprep.subr.mxu0 0.0
    %82 = vmatpush1.xpose.msra.mxu0 %v70
    %83 = vmatprep.subr.mxu0 0.0
    %84 = vmatpush1.xpose.msra.mxu0 %v73
    %85 = vmatprep.subr.mxu0 0.0
    %86 = vmatpush1.xpose.msra.mxu0 %v76
    %87 = vmatprep.subr.mxu0 0.0
    %88 = vmatpush1.xpose.msra.mxu0 %v79
    %89 = vmatprep.subr.mxu0 0.0
    %90 = vmatpush1.xpose.msra.mxu0 0.0
    %91 = vmatprep.subr.mxu0 0.0
    %92 = vmatpush1.xpose.msra.mxu0 0.0
    %93 = vmatprep.subr.mxu0 0.0
    %94 = vmatpush1.xpose.msra.mxu0 0.0
    %95 = vmatprep.subr.mxu0 0.0
    %96 = vmatpush1.xpose.msra.mxu0 0.0
    %97 = vmatprep.subr.mxu0 0.0
    %98 = vmatpush1.xpose.msra.mxu0 0.0
    %99 = vmatprep.subr.mxu0 0.0
    %100 = vmatpush1.xpose.msra.mxu0 0.0
    %101 = vmatprep.subr.mxu0 0.0
    %102 = vmatpush1.xpose.msra.mxu0 0.0
    %103 = vmatprep.subr.mxu0 0.0
    %104 = vmatpush1.xpose.msra.mxu0 0.0
    %105 = vmatprep.subr.mxu0 0.0
    %106 = vmatpush1.xpose.msra.mxu0 0.0
    %107 = vmatprep.subr.mxu0 0.0
    %108 = vmatpush1.xpose.msra.mxu0 0.0
    %109 = vmatprep.subr.mxu0 0.0
    %110 = vmatpush1.xpose.msra.mxu0 0.0
    %111 = vmatprep.subr.mxu0 0.0
    %112 = vmatpush1.xpose.msra.mxu0 0.0
    %113 = vmatprep.subr.mxu0 0.0
    %114 = vmatpush1.xpose.msra.mxu0 0.0
    %115 = vmatprep.subr.mxu0 0.0
    %116 = vmatpush1.xpose.msra.mxu0 0.0
    %117 = vmatprep.subr.mxu0 0.0
    %118 = vmatpush1.xpose.msra.mxu0 0.0
    %119 = vmatprep.subr.mxu0 0.0
    %120 = vmatpush1.xpose.msra.mxu0 0.0
    %121 = vmatprep.subr.mxu0 0.0
    %122 = vmatpush1.xpose.msra.mxu0 0.0
    %123 = vmatprep.subr.mxu0 0.0
    %124 = vmatpush1.xpose.msra.mxu0 0.0
    %125 = vmatprep.subr.mxu0 0.0
    %126 = vmatpush1.xpose.msra.mxu0 0.0
    %127 = vmatprep.subr.mxu0 0.0
    %128 = vmatpush1.xpose.msra.mxu0 0.0
    %129 = vmatprep.subr.mxu0 0.0
    %130 = vmatpush1.xpose.msra.mxu0 0.0
    %131 = vmatprep.subr.mxu0 0.0
    %132 = vmatpush1.xpose.msra.mxu0 0.0
    %133 = vmatprep.subr.mxu0 0.0
    %134 = vmatpush1.xpose.msra.mxu0 0.0
    %135 = vmatprep.subr.mxu0 0.0
    %136 = vmatpush1.xpose.msra.mxu0 0.0
    %137 = vmatprep.subr.mxu0 0.0
    %138 = vmatpush1.xpose.msra.mxu0 0.0
    %139 = vmatprep.subr.mxu0 0.0
    %140 = vmatpush1.xpose.msra.mxu0 0.0
    %141 = vmatprep.subr.mxu0 0.0
    %142 = vmatpush1.xpose.msra.mxu0 0.0
    %143 = vmatprep.subr.mxu0 0.0
    %144 = vmatpush1.xpose.msra.mxu0 0.0
    %145 = vmatprep.mubr.f32.mxu0 0.0
    %146 = vmatmul.mubr.f32.gmra.mrb[0].mxu0 %v67
    %v147 = vpop.f32.mrb[0].mxu0
    %v148 = vadd.f32 %v63, %v147
    %v149 = vpop.f32.mrb[0].mxu0
    %150 = vdwg.mxu0
    %v151 = vld [vmem:[#allocation2] sm:$0x3]
    %v152 = vld [vmem:[#allocation2 + $0x2] sm:$0x3]
    %v153 = vld [vmem:[#allocation2 + $0x4] sm:$0x3]
    %v154 = vld [vmem:[#allocation2 + $0x6] sm:$0x3]
    %v155 = vld [vmem:[#allocation2 + $0x8] sm:$0x3]
    %v156 = vld [vmem:[#allocation2 + $0xa] sm:$0x3]
    %v157 = vld [vmem:[#allocation2 + $0xc] sm:$0x3]
    %v158 = vld [vmem:[#allocation2 + $0xe] sm:$0x3]
    %v159 = vmul.f32 %v151, %v148
    %v160 = vmul.f32 %v152, %v148
    %v161 = vmul.f32 %v153, %v148
    %v162 = vmul.f32 %v154, %v148
    %v163 = vmul.f32 %v155, %v148
    %v164 = vmul.f32 %v156, %v148
    %v165 = vmul.f32 %v157, %v148
    %v166 = vmul.f32 %v158, %v148
    %vm167 = vcmask 254976
    %168 = vst.msk [vmem:[#allocation7] sm:$0x3] %vm167, %v159
    %169 = vst.msk [vmem:[#allocation7 + $0x2] sm:$0x3] %vm167, %v160
    %170 = vst.msk [vmem:[#allocation7 + $0x4] sm:$0x3] %vm167, %v161
    %171 = vst.msk [vmem:[#allocation7 + $0x6] sm:$0x3] %vm167, %v162
    %172 = vst.msk [vmem:[#allocation7 + $0x8] sm:$0x3] %vm167, %v163
    %173 = vst.msk [vmem:[#allocation7 + $0xa] sm:$0x3] %vm167, %v164
    %174 = vst.msk [vmem:[#allocation7 + $0xc] sm:$0x3] %vm167, %v165
    %175 = vst.msk [vmem:[#allocation7 + $0xe] sm:$0x3] %vm167, %v166
    // Predicated region
    $region26: #{tpu_custom_call.1} parent=1 // pred_check
      _
    $region27: #{tpu_custom_call.1} parent=1 // pred_check_branch
      %177 = sbr.rel (0) target = $region29
    $region28: #{tpu_custom_call.1} parent=1 // pred_region
      %s179 = ssub.s32 256, 256
      %180 = vsyncadd [#allocation4], %s179
      %s181 = sshll.u32 [#allocation7], 4
      %s182 = int_to_ptr.vmem [resolvable:$true] %s181
      %187 = dma.vmem_to_hbm [thread:$0]  %s182, 256, %s4, [#allocation4], 32, 32, 2
    $region29: #{tpu_custom_call.1} parent=1 // pred_fallthru
      _
    // Predicated region
    $region30: #{tpu_custom_call.1} parent=1 // pred_check
      _
    $region31: #{tpu_custom_call.1} parent=1 // pred_check_branch
      %189 = sbr.rel (0) target = $region33
    $region32: #{tpu_custom_call.1} parent=1 // pred_region
      %190 = dma.done [#allocation4], 256
    $region33: #{tpu_custom_call.1} parent=1 // pred_fallthru
      _
    %191 = vsyncpa [#allocation3], 1
    %192 = vsyncpa [#allocation6], 1
    %193 = vsyncpa [#allocation4], 1

</llo_original>
